<compile_context>
chip_gen: v7x
topology: tpu7x:2x2x1
jax: 0.10.0
libtpu: 0.0.40
codegen_flags: <defaults>
</compile_context>

<pallas_src>
import numpy as np
import jax
import jax.numpy as jnp
from jax.experimental import pallas as pl
from jax.experimental.pallas import tpu as pltpu

_INV_SQRT2 = 0.7071067811865476
_EPS = 1e-5


def _gelu_exact(v):
    # PyTorch nn.GELU() default (erf-based, exact).
    # (If profiling shows VALU saturation on v5e, jax.nn.gelu(approximate=True) moves
    #  the transcendental to the EUP slot, at the cost of exact-erf parity.)
    return 0.5 * v * (1.0 + jax.lax.erf(v * _INV_SQRT2))


def _chunk_plan(C, shift_size):
    """torch.chunk(x, shift_size, dim=1) boundaries zipped with shifts range(-pad, pad+1)."""
    pad = shift_size // 2
    chunk = -(-C // shift_size)  # ceil
    shifts = list(range(-pad, pad + 1))
    plan, start, i = [], 0, 0
    while start < C and i < len(shifts):
        end = min(start + chunk, C)
        plan.append((start, end, shifts[i]))
        start, i = end, i + 1
    assert start == C, "channel count too small for shift_size (torch_shift would drop channels)"
    return plan


def _shape_consts(D, H, W, C, shift_size, dtype):
    """Host-precomputed shape-only constants (all index math hoisted off the TPU).

    s_mat : (DHW, D*H)  ones matrix; (v @ s_mat) = per-W-group sums (factored LN stats).
    st_mat: (D*H, DHW)  transpose scaled by 1/W; broadcasts group means back to lanes.
    cmask : (n_chunks, C, 1)    channel-chunk membership (0/1).
    bmask : (3, n_chunks, 1, DHW) zero-padding border validity per (axis, chunk) (0/1).
    """
    DHW, DH = D * H * W, D * H
    p = np.arange(DHW, dtype=np.int64)
    grp = p // W
    s_mat = np.zeros((DHW, DH), np.float32)
    s_mat[p, grp] = 1.0
    st_mat = s_mat.T * (1.0 / W)

    lidx = np.stack([(p // (H * W)) % D, (p // W) % H, p % W])  # (3, DHW) local indices
    extents = (D, H, W)
    plan = _chunk_plan(C, shift_size)
    nck = len(plan)
    cmask = np.zeros((nck, C, 1), np.float32)
    bmask = np.ones((3, nck, 1, DHW), np.float32)
    for k, (c0, c1, s) in enumerate(plan):
        cmask[k, c0:c1, 0] = 1.0
        for ax in range(3):
            if s > 0:
                bmask[ax, k, 0] = (lidx[ax] >= s).astype(np.float32)
            elif s < 0:
                bmask[ax, k, 0] = (lidx[ax] < extents[ax] + s).astype(np.float32)
    return (jnp.asarray(s_mat, dtype), jnp.asarray(st_mat, dtype),
            jnp.asarray(cmask, dtype), jnp.asarray(bmask, dtype))


def _vmem_limit_bytes():
    """Generation-aware scoped-VMEM limit: ~3/4 of physical, capped at 100 MiB.
    v5e/v6e (128 MiB physical) -> ~96 MiB; v7x (64 MiB physical) -> ~48 MiB."""
    try:
        cap = int(pltpu.get_tpu_info().vmem_capacity_bytes)
    except Exception:
        cap = 64 * 1024 * 1024
    return max(32 * 1024 * 1024, min((cap * 3) // 4, 100 * 1024 * 1024))


# --------------------------------------------------------------------------------------
# pltpu.roll direction probe (cached): +1 if pltpu.roll == jnp.roll (out[i] = x[i-s]).
# Guards the axial-shift border masks against any rotate-convention difference.
# --------------------------------------------------------------------------------------
def _roll_probe_kernel(x_ref, o_ref):
    o_ref[...] = pltpu.roll(x_ref[...], 1, axis=1)


_ROLL_SIGN = None


def _pltpu_roll_sign():
    global _ROLL_SIGN
    if _ROLL_SIGN is None:
        x = jnp.broadcast_to(jnp.arange(128, dtype=jnp.float32)[None, :], (8, 128))
        out = pl.pallas_call(
            _roll_probe_kernel,
            out_shape=jax.ShapeDtypeStruct((8, 128), jnp.float32),
        )(x)
        _ROLL_SIGN = 1 if float(out[0, 1]) == 0.0 else -1
    return _ROLL_SIGN


# --------------------------------------------------------------------------------------
# Pallas kernel: ALL `depth` AxialShiftedBlocks fused, one batch sample per grid step.
# Working layout: (C, D*H*W) per sample -- channels on sublanes, spatial on lanes.
# --------------------------------------------------------------------------------------
def make_asstage_kernel(D, H, W, C, depth, shift_size, matmul_dtype):
    DHW = D * H * W
    plan = _chunk_plan(C, shift_size)
    axes = ((H * W, D), (W, H), (1, W))  # (lane stride, local extent) for torch dims 2,3,4
    roll_sign = _pltpu_roll_sign()

    def kernel(x_ref, s_ref, st_ref, cmask_ref, bmask_ref, ln_ref, gn_ref,
               cw_ref, cb_ref, f1w_ref, f1b_ref, f2w_ref, f2b_ref, o_ref):
        s_mat = s_ref[...]     # (DHW, DH) {0,1}     matmul dtype
        st_mat = st_ref[...]   # (DH, DHW) {0,1/W}   matmul dtype

        def group_avg(v):
            # Mean of v over each lane's W-group: factored skinny matmuls (MXU),
            # f32 accumulation. Replaces the old O(DHW^2) averaging matrix.
            sums = jnp.dot(v.astype(s_mat.dtype), s_mat,
                           preferred_element_type=jnp.float32)
            return jnp.dot(sums.astype(st_mat.dtype), st_mat,
                           preferred_element_type=jnp.float32)

        def layer_norm(v, blk, idx):
            # nn.LayerNorm(dim) on NCDHW == normalize over W (requires W == dim).
            mu = group_avg(v)
            c = v - mu
            var = group_avg(c * c)
            return c * jax.lax.rsqrt(var + _EPS) * ln_ref[blk, idx] + ln_ref[blk, idx + 1]

        def group_norm(v, blk, idx):
            # nn.GroupNorm(1, C): two-pass (sum, then sum of centered squares) in f32.
            inv_n = 1.0 / float(C * DHW)
            mu = jnp.sum(v) * inv_n
            cen = v - mu
            var = jnp.sum(cen * cen) * inv_n
            return cen * jax.lax.rsqrt(var + _EPS) * gn_ref[blk, idx] + gn_ref[blk, idx + 1]

        def conv(v, blk, i):
            # 1x1x1 Conv3d == (Cout, Cin) @ (Cin, DHW) on the MXU, f32 accumulation.
            w = cw_ref[blk, i]
            return jnp.dot(w, v.astype(w.dtype),
                           preferred_element_type=jnp.float32) + cb_ref[blk, i]

        def block_forward(x_in, blk):
            # ------------------------- AxialShiftedBlock -------------------------
            x1 = layer_norm(x_in, blk, 0)                         # block norm1
            x1 = _gelu_exact(group_norm(conv(x1, blk, 0), blk, 0))  # conv1 -> GN1 -> GELU
            # Shift section on a single matmul-dtype copy (bit-identical: rolls are
            # permutations, masks are 0/1 multiplies; chunk supports are disjoint).
            xb = x1.astype(matmul_dtype)
            vks = [xb * cmask_ref[k] for k in range(len(plan))]   # channel-chunk copies
            branches = None
            for axis in range(3):                                 # torch dims 2 (D), 3 (H), 4 (W)
                stride, _ = axes[axis]
                shifted = None
                for k, (_, _, s) in enumerate(plan):
                    if s == 0:
                        term = vks[k]
                    else:
                        amount = (roll_sign * s * stride) % DHW
                        term = pltpu.roll(vks[k], amount, axis=1) * bmask_ref[axis, k]
                    shifted = term if shifted is None else shifted + term
                br = _gelu_exact(conv(shifted, blk, 1 + axis))
                branches = br if branches is None else branches + br
            x2 = x_in + conv(group_norm(branches, blk, 2), blk, 4)  # GN2 -> conv3 -> residual
            # ------------------------------ MLP ----------------------------------
            z = layer_norm(x2, blk, 2)                            # block norm2
            w1 = f1w_ref[blk]
            z = jnp.dot(w1, z.astype(w1.dtype),
                        preferred_element_type=jnp.float32) + f1b_ref[blk]
            z = _gelu_exact(z)
            w2 = f2w_ref[blk]
            z = jnp.dot(w2, z.astype(w2.dtype),
                        preferred_element_type=jnp.float32) + f2b_ref[blk]
            return x2 + z                                         # (drop = Identity)

        x = x_ref[0]                                              # (C, DHW) f32, lane-dense
        for blk in range(depth):                                  # fused blocks, no HBM round trip
            x = block_forward(x, blk)
        o_ref[0] = x

    return kernel


def as_stage_pallas(x_flat, pk, spatial, shift_size):
    """Apply all fused AxialShiftedBlocks. x_flat: (B, C, D*H*W) f32 (flattened NCDHW)."""
    B, C, DHW = x_flat.shape
    D, H, W = spatial
    depth = pk["cw"].shape[0]
    matmul_dtype = pk["cw"].dtype
    kernel = make_asstage_kernel(D, H, W, C, depth, shift_size, matmul_dtype)

    def const_spec(arr):
        n = arr.ndim
        return pl.BlockSpec(arr.shape, lambda b, _n=n: (0,) * _n)

    # TODO(synk): on v7x, single-buffer the constant inputs (pipeline_mode=pl.Buffered(1)
    # or a one-time weight DMA into scratch) and tile the grid over D with a
    # shift_size//2 halo plus a two-pass GroupNorm for large D*H*W.
    consts = [pk[k] for k in ("s", "st", "cmask", "bmask", "ln", "gn", "cw", "cb",
                              "f1w", "f1b", "f2w", "f2b")]
    return pl.pallas_call(
        kernel,
        grid=(B,),                                                # one sample per grid step
        out_shape=jax.ShapeDtypeStruct((B, C, DHW), jnp.float32),
        in_specs=[pl.BlockSpec((1, C, DHW), lambda b: (b, 0, 0))] +
                 [const_spec(a) for a in consts],
        out_specs=pl.BlockSpec((1, C, DHW), lambda b: (b, 0, 0)),
        input_output_aliases={0: 0},                              # in-place activation update
        compiler_params=pltpu.CompilerParams(
            dimension_semantics=("parallel",),                    # feeds both v7x TensorCores
            vmem_limit_bytes=_vmem_limit_bytes()),
    )(x_flat, *consts)


def double_as_block(x_ncdhw, packed, shift_size):
    """DoubleASBlock.forward: fused sequential AxialShiftedBlocks, downsample=None."""
    B, C, D, H, W = x_ncdhw.shape
    x = x_ncdhw.astype(jnp.float32).reshape(B, C, D * H * W)      # flattened NCDHW (lane-dense)
    # TODO(synk): optionally stream activations as bf16 at the call boundary to halve I/O.
    x = as_stage_pallas(x, packed, (D, H, W), shift_size)
    # TODO(synk): downsample module not provided (downsample=None path only).
    return x.reshape(B, C, D, H, W)


# --------------------------------------------------------------------------------------
# Parameter construction (deterministic, synthetic) + packing for the fused kernel.
# --------------------------------------------------------------------------------------
def init_block_params(key, C, hidden):
    ks = jax.random.split(key, 22)
    def Wm(k, o, i): return jax.random.normal(k, (o, i), jnp.float32) * (0.5 / np.sqrt(i))
    def Bv(k, o): return jax.random.normal(k, (o,), jnp.float32) * 0.02
    def Gv(k, o): return 1.0 + 0.1 * jax.random.normal(k, (o,), jnp.float32)
    return dict(
        ln1_g=Gv(ks[0], C),   ln1_b=Bv(ks[1], C),
        conv1_w=Wm(ks[2], C, C),  conv1_b=Bv(ks[3], C),
        gn1_g=Gv(ks[4], C),   gn1_b=Bv(ks[5], C),
        c21_w=Wm(ks[6], C, C),    c21_b=Bv(ks[7], C),
        c22_w=Wm(ks[8], C, C),    c22_b=Bv(ks[9], C),
        c23_w=Wm(ks[10], C, C),   c23_b=Bv(ks[11], C),
        gn2_g=Gv(ks[12], C),  gn2_b=Bv(ks[13], C),
        conv3_w=Wm(ks[14], C, C), conv3_b=Bv(ks[15], C),
        ln2_g=Gv(ks[16], C),  ln2_b=Bv(ks[17], C),
        fc1_w=Wm(ks[18], hidden, C), fc1_b=Bv(ks[19], hidden),
        fc2_w=Wm(ks[20], C, hidden), fc2_b=Bv(ks[21], C),
    )


def pack_stage_params(raw_list, D, H, W, C, shift_size, matmul_dtype=jnp.bfloat16):
    # nn.LayerNorm(dim) applied to an NCDHW tensor normalizes the W axis with a
    # weight of length dim => requires W == dim.
    assert W == C, "nn.LayerNorm(dim) on an NCDHW tensor requires W == dim"
    def stack(fn): return jnp.stack([fn(p) for p in raw_list])
    # LN gamma/beta as per-lane rows over the flattened D*H*W axis (value at lane p is g[p % W]).
    ln = stack(lambda p: jnp.stack([jnp.tile(p[k], D * H)[None, :]
                                    for k in ("ln1_g", "ln1_b", "ln2_g", "ln2_b")]))
    gn = stack(lambda p: jnp.stack([p[k][:, None]
                                    for k in ("gn1_g", "gn1_b", "gn2_g", "gn2_b")]))
    cw = stack(lambda p: jnp.stack([p[k] for k in
                                    ("conv1_w", "c21_w", "c22_w", "c23_w", "conv3_w")])
               ).astype(matmul_dtype)
    cb = stack(lambda p: jnp.stack([p[k][:, None] for k in
                                    ("conv1_b", "c21_b", "c22_b", "c23_b", "conv3_b")]))
    f1w = stack(lambda p: p["fc1_w"]).astype(matmul_dtype)
    f1b = stack(lambda p: p["fc1_b"][:, None])
    f2w = stack(lambda p: p["fc2_w"]).astype(matmul_dtype)
    f2b = stack(lambda p: p["fc2_b"][:, None])
    s_mat, st_mat, cmask, bmask = _shape_consts(D, H, W, C, shift_size, matmul_dtype)
    return dict(s=s_mat, st=st_mat, cmask=cmask, bmask=bmask, ln=ln, gn=gn,
                cw=cw, cb=cb, f1w=f1w, f1b=f1b, f2w=f2w, f2b=f2b)


# --------------------------------------------------------------------------------------
# Pure-JAX reference (NCDHW, mirrors the PyTorch forward) for validation.
# --------------------------------------------------------------------------------------
def _zero_shift(v, s, axis):
    """Zero-padded shift by static s along static axis: out[p] = v[p - s], 0 outside."""
    if s == 0:
        return v
    L = v.shape[axis]
    zshape = list(v.shape)
    if s > 0:
        zshape[axis] = s
        body = jax.lax.slice_in_dim(v, 0, L - s, axis=axis)
        return jnp.concatenate([jnp.zeros(zshape, v.dtype), body], axis=axis)
    zshape[axis] = -s
    body = jax.lax.slice_in_dim(v, -s, L, axis=axis)
    return jnp.concatenate([body, jnp.zeros(zshape, v.dtype)], axis=axis)


def ref_torch_shift(x, shift_size, dim):
    C = x.shape[1]
    pieces = [_zero_shift(x[:, c0:c1], s, dim) for (c0, c1, s) in _chunk_plan(C, shift_size)]
    return jnp.concatenate(pieces, axis=1)


def ref_block(x, pr, shift_size, matmul_dtype=jnp.float32, stats_dtype=jnp.float32):
    C = x.shape[1]

    def ln(v, g, b):
        # stats_dtype=f32 -> exact nn.LayerNorm semantics; bf16 -> like-for-like with the
        # kernel's bf16-operand LN stats matmuls (values rounded to bf16, f32 accumulation).
        vs = v.astype(stats_dtype).astype(jnp.float32)
        mu = jnp.mean(vs, axis=-1, keepdims=True)
        c = v - mu
        cs = (c * c).astype(stats_dtype).astype(jnp.float32)
        var = jnp.mean(cs, axis=-1, keepdims=True)
        return c / jnp.sqrt(var + _EPS) * g + b

    def gnorm(v, g, b):
        mu = jnp.mean(v, axis=(1, 2, 3, 4), keepdims=True)
        var = jnp.mean((v - mu) ** 2, axis=(1, 2, 3, 4), keepdims=True)
        vn = (v - mu) / jnp.sqrt(var + _EPS)
        return vn * g.reshape(1, C, 1, 1, 1) + b.reshape(1, C, 1, 1, 1)

    def conv(v, w, b):
        y = jnp.einsum("oc,bcdhw->bodhw", w.astype(matmul_dtype), v.astype(matmul_dtype),
                       preferred_element_type=jnp.float32)
        return y + b.reshape(1, -1, 1, 1, 1)

    shortcut = x
    x = ln(x, pr["ln1_g"], pr["ln1_b"])
    x = conv(x, pr["conv1_w"], pr["conv1_b"])
    x = gnorm(x, pr["gn1_g"], pr["gn1_b"])
    x = _gelu_exact(x)
    x_lr = ref_torch_shift(x, shift_size, 2)
    x_td = ref_torch_shift(x, shift_size, 3)
    x_dp = ref_torch_shift(x, shift_size, 4)
    x_lr = _gelu_exact(conv(x_lr, pr["c21_w"], pr["c21_b"]))
    x_td = _gelu_exact(conv(x_td, pr["c22_w"], pr["c22_b"]))
    x_dp = _gelu_exact(conv(x_dp, pr["c23_w"], pr["c23_b"]))
    x = x_lr + x_td + x_dp
    x = gnorm(x, pr["gn2_g"], pr["gn2_b"])
    x = conv(x, pr["conv3_w"], pr["conv3_b"])
    x = shortcut + x
    y = ln(x, pr["ln2_g"], pr["ln2_b"])
    y = conv(y, pr["fc1_w"], pr["fc1_b"])
    y = _gelu_exact(y)
    y = conv(y, pr["fc2_w"], pr["fc2_b"])
    return x + y


if __name__ == "__main__":
    # Small shapes consistent with the module; nn.LayerNorm(dim) applied directly to the
    # NCDHW tensor in the reference forward requires W == dim.
    B, C, D, H, W = 2, 8, 4, 8, 8
    shift_size = 3
    depth = 2                      # "Double" AS block
    mlp_ratio = 4.0
    hidden = int(C * mlp_ratio)

    key = jax.random.PRNGKey(0)
    kx, kp = jax.random.split(key)
    x = jax.random.normal(kx, (B, C, D, H, W), jnp.float32)
    raw_params = [init_block_params(k, C, hidden) for k in jax.random.split(kp, depth)]

    def run_kernel(matmul_dtype):
        packed = pack_stage_params(raw_params, D, H, W, C, shift_size, matmul_dtype)
        return jax.block_until_ready(double_as_block(x, packed, shift_size))

    def run_ref(matmul_dtype, stats_dtype):
        r = x
        for p in raw_params:
            r = ref_block(r, p, shift_size, matmul_dtype, stats_dtype)
        return jax.block_until_ready(r)

    # 1) f32-matmul configuration: tight structural + numerical check vs pure-JAX reference
    #    (exact PyTorch forward semantics).
    err_f32 = float(jnp.max(jnp.abs(run_kernel(jnp.float32) - run_ref(jnp.float32, jnp.float32))))
    if not (np.isfinite(err_f32) and err_f32 < 5e-3):
        raise AssertionError(f"f32 path mismatch vs reference: max|err|={err_f32}")

    # 2) bf16-matmul configuration (MXU perf path for v5e/v6e/v7x): like-for-like sanity
    #    check against a reference using the same bf16-operand / f32-accumulate dots and
    #    bf16-rounded LN stats operands.
    err_bf16 = float(jnp.max(jnp.abs(run_kernel(jnp.bfloat16) - run_ref(jnp.bfloat16, jnp.bfloat16))))
    if not (np.isfinite(err_bf16) and err_bf16 < 1e-1):
        raise AssertionError(f"bf16 path mismatch vs bf16 reference: max|err|={err_bf16}")

    print("KERNEL_OK")
</pallas_src>

<mosaic_0001>
module attributes {stable_mosaic.version = 11 : i64} {
  func.func @_roll_probe_kernel(%arg0: memref<8x128xf32, #tpu.memory_space<vmem>>, %arg1: memref<8x128xf32, #tpu.memory_space<vmem>>) attributes {dimension_semantics = [], scalar_prefetch = 0 : i64, scratch_operands = 0 : i64, tpu.core_type = #tpu.core_type<tc>} {
    %c0 = arith.constant 0 : index
    %c0_0 = arith.constant 0 : index
    %0 = vector.load %arg0[%c0, %c0_0] : memref<8x128xf32, #tpu.memory_space<vmem>>, vector<8x128xf32>
    %c1_i32 = arith.constant 1 : i32
    %1 = tpu.dynamic_rotate %0 by %c1_i32 dim 1 : vector<8x128xf32>, i32 -> vector<8x128xf32>
    %c0_1 = arith.constant 0 : index
    %c0_2 = arith.constant 0 : index
    %2 = vector.load %arg1[%c0_1, %c0_2] : memref<8x128xf32, #tpu.memory_space<vmem>>, vector<8x128xf32>
    tpu.vector_store %arg1[%c0_1, %c0_2], %1 {strides = array<i32>} : memref<8x128xf32, #tpu.memory_space<vmem>>, vector<8x128xf32>,
    return
  }
}

</mosaic_0001>

<llo_original>
// kernel: tpu_custom_call.1
$region0: #{tpu_custom_call.1}
  #allocation0 [shape = 'u32[]', space=smem, size = 0x4, offset = 0x4, fixed_abs, tag = 'smem constant byte address 0x4 - core index']
  #allocation1 [shape = 'u32[144,128]{1,0:T(1,128)}', space=vmem, size = 0x12000, scoped, tag = 'internal scratch']
  %s0 = inlined_call_operand.hbm [shape: f32[8,128], index: 0, kind: input, shape index: {}]
  %s1 = inlined_call_operand.hbm [shape: f32[8,128], index: 1, kind: output, shape index: {}]
  %s2 = sld [smem:[#allocation0]]
  $region18: #{tpu_custom_call.1} parent=0
    _
  %s4 = ssub.s32 1, %s2
  %s5 = scalar_select 0, %s4, %s2
  $region1: #{tpu_custom_call.1} parent=0
    #allocation2 [shape = 'u8[4096]{0}', space=vmem, size = 0x1000, scoped, tag = 'input window, operand 0, single buffered']
    #allocation3 [shape = 's32[1]{0}', space=sflag, size = 0x4, scoped, tag = 'scoped memory for tpu_custom_call.1']
    #allocation4 [shape = 's32[1]{0}', space=sflag, size = 0x4, scoped, tag = 'scoped memory for tpu_custom_call.1']
    #allocation5 [shape = 'u8[4096]{0}', space=vmem, size = 0x1000, scoped, tag = 'output window, operand 0, single buffered']
    %6 = vsyncpa [#allocation3], 0
    %7 = vsyncpa [#allocation4], 0
    // Predicated region
    $region2: #{tpu_custom_call.1} parent=1 // pred_check
      _
    $region3: #{tpu_custom_call.1} parent=1 // pred_check_branch
      %9 = sbr.rel (0) target = $region5
    $region4: #{tpu_custom_call.1} parent=1 // pred_region
      %s11 = ssub.s32 128, 128
      %12 = vsyncadd [#allocation3], %s11
      %s14 = sshll.u32 [#allocation2], 4
      %s15 = int_to_ptr.vmem [resolvable:$true] %s14
      %17 = dma.hbm_to_vmem [thread:$0]  %s0, 128, %s15, [#allocation3]
    $region5: #{tpu_custom_call.1} parent=1 // pred_fallthru
      _
    // Predicated region
    $region6: #{tpu_custom_call.1} parent=1 // pred_check
      _
    $region7: #{tpu_custom_call.1} parent=1 // pred_check_branch
      %19 = sbr.rel (0) target = $region9
    $region8: #{tpu_custom_call.1} parent=1 // pred_region
      %20 = dma.done [#allocation3], 128
    $region9: #{tpu_custom_call.1} parent=1 // pred_fallthru
      _
    %v21 = vld [vmem:[#allocation2] sm:$0xff]
    %22 = vrot.lane.b32.xlu0 %v21, 1
    %v23 = vpop.permute.xlu0 %22
    %24 = vst [vmem:[#allocation5] sm:$0xff] %v23
    // Predicated region
    $region10: #{tpu_custom_call.1} parent=1 // pred_check
      _
    $region11: #{tpu_custom_call.1} parent=1 // pred_check_branch
      %26 = sbr.rel (0) target = $region13
    $region12: #{tpu_custom_call.1} parent=1 // pred_region
      %s28 = ssub.s32 128, 128
      %29 = vsyncadd [#allocation4], %s28
      %s31 = sshll.u32 [#allocation5], 4
      %s32 = int_to_ptr.vmem [resolvable:$true] %s31
      %34 = dma.vmem_to_hbm [thread:$0]  %s32, 128, %s1, [#allocation4]
    $region13: #{tpu_custom_call.1} parent=1 // pred_fallthru
      _
    // Predicated region
    $region14: #{tpu_custom_call.1} parent=1 // pred_check
      _
    $region15: #{tpu_custom_call.1} parent=1 // pred_check_branch
      %36 = sbr.rel (0) target = $region17
    $region16: #{tpu_custom_call.1} parent=1 // pred_region
      %37 = dma.done [#allocation4], 128
    $region17: #{tpu_custom_call.1} parent=1 // pred_fallthru
      _
    %38 = vsyncpa [#allocation3], 1
    %39 = vsyncpa [#allocation4], 1

</llo_original>
